<compile_context>
chip_gen: v5e
topology: v5e:2x2
jax: 0.10.0
libtpu: 0.0.40
codegen_flags: <defaults>
</compile_context>

<pallas_src>
import jax
import jax.numpy as jnp
import numpy as np
from jax import lax
from jax.experimental import pallas as pl
from jax.experimental.pallas import tpu as pltpu


def _make_kernel(rows, F, K, P, C):
    """Builds the fused per-sample forward kernel for static shapes."""
    K3 = 6
    L1 = rows - K + 1          # after conv1
    L2 = L1 - K + 1            # after conv2
    L3 = L2 - K3 + 1           # after conv3
    Lp = L3 // P               # after max_pool (floor mode)
    Wv = (Lp - 1) * P + 1      # window width fed to dense1 (pool folded in)

    def kernel(x_ref, w1_ref, b1_ref, w2_ref, b2_ref, w3_ref, b3_ref,
               wd1e_ref, bd1_ref, wd2_ref, bd2_ref, out_ref):
        x = x_ref[0]                                    # (1, rows) one sample / grid step

        # conv1 (in_channels = 1) + ReLU  ->  im2col matmul
        X1 = jnp.concatenate([x[:, k:k + L1] for k in range(K)], axis=0)      # (K, L1)
        h1 = jnp.dot(w1_ref[...], X1, preferred_element_type=jnp.float32) + b1_ref[...]
        h1 = jnp.maximum(h1, 0.0)                       # (F, L1)

        # conv2 + ReLU
        X2 = jnp.concatenate([h1[:, k:k + L2] for k in range(K)], axis=0)     # (K*F, L2)
        h2 = jnp.dot(w2_ref[...], X2, preferred_element_type=jnp.float32) + b2_ref[...]
        h2 = jnp.maximum(h2, 0.0)                       # (F, L2)

        # conv3 (kernel size 6) + ReLU
        X3 = jnp.concatenate([h2[:, k:k + L3] for k in range(K3)], axis=0)    # (K3*F, L3)
        h3 = jnp.dot(w3_ref[...], X3, preferred_element_type=jnp.float32) + b3_ref[...]
        h3 = jnp.maximum(h3, 0.0)                       # (F, L3)

        # TODO(synk): dropout1/2/3 are identity (eval mode); training-mode RNG
        # masks not reproduced.

        # MaxPool1d(P): running max over the P phases (P-1 VPU maxes).  The
        # "every P-th column" selection is folded into the zero-padded dense1
        # weights wd1e, so m[:, j*P] == pooled[:, j] and no strided extract
        # (or Lp-way concat) is needed here.
        m = h3[:, 0:Wv]
        for p in range(1, P):
            m = jnp.maximum(m, h3[:, p:p + Wv])         # (F, Wv)

        # flatten (f*Lp + j order) + dense1 + ReLU.  Block-diagonal contraction
        # as F small matmuls; a single matmul would need a sublane->lane
        # flatten (relayout) of m, which Mosaic handles poorly at these shapes.
        acc = bd1_ref[...]                              # (1, 64)
        for f in range(F):
            acc = acc + jnp.dot(m[f:f + 1, :], wd1e_ref[f],
                                preferred_element_type=jnp.float32)
        d1 = jnp.maximum(acc, 0.0)                      # (1, 64)

        # dense2 + softmax(dim=1); reciprocal on EUP + one Newton refinement.
        logits = (jnp.dot(d1, wd2_ref[...], preferred_element_type=jnp.float32)
                  + bd2_ref[...])                       # (1, C)
        mx = jnp.max(logits, axis=-1, keepdims=True)
        e = jnp.exp(logits - mx)
        s = jnp.sum(e, axis=-1, keepdims=True)
        r = pl.reciprocal(s, approx=True)
        r = r * (2.0 - s * r)                           # Newton step -> full f32 accuracy
        out_ref[0] = e * r

    return kernel, Wv, Lp


def tcpdump_forward(x, params, *, num_classes, rows, nb_filters, psize, ksize):
    """Glue: parameter re-layout (plain JAX) + gridded pallas_call over batch."""
    B = x.shape[0]
    F, K, P, C, K3 = nb_filters, ksize, psize, num_classes, 6

    kernel, Wv, Lp = _make_kernel(rows, F, K, P, C)

    w1c, b1, w2c, b2, w3c, b3, wd1, bd1, wd2, bd2 = params

    # Re-layout weights for the in-kernel im2col matmuls (pure glue).
    w1 = w1c[:, 0, :]                                          # (F, K)
    w2f = jnp.transpose(w2c, (0, 2, 1)).reshape(F, K * F)      # w2f[f, k*F+c] = w2c[f, c, k]
    w3f = jnp.transpose(w3c, (0, 2, 1)).reshape(F, K3 * F)
    wd1r = wd1.reshape(64, F, Lp).transpose(1, 2, 0)           # (F, Lp, 64)
    # Zero-padded dense1 weights: only rows at lane offsets j*P are non-zero,
    # which performs the pool-window selection inside the dense1 matmul.
    wd1e = jnp.zeros((F, Wv, 64), jnp.float32).at[:, ::P, :].set(wd1r)
    wd2t = wd2.T                                               # (64, C)

    x3 = x.astype(jnp.float32)[:, None, :]                     # (B, 1, rows)

    args = (x3,
            w1, b1.reshape(F, 1),
            w2f, b2.reshape(F, 1),
            w3f, b3.reshape(F, 1),
            wd1e, bd1.reshape(1, 64),
            wd2t, bd2.reshape(1, C))

    def full_spec(shape):
        nd = len(shape)
        return pl.BlockSpec(shape, lambda b, _nd=nd: (0,) * _nd)

    in_specs = [pl.BlockSpec((1, 1, rows), lambda b: (b, 0, 0))]  # one sample per step
    in_specs += [full_spec(a.shape) for a in args[1:]]            # weights: full, resident

    out = pl.pallas_call(
        kernel,
        out_shape=jax.ShapeDtypeStruct((B, 1, C), jnp.float32),
        grid=(B,),
        in_specs=in_specs,
        out_specs=pl.BlockSpec((1, 1, C), lambda b: (b, 0, 0)),
        compiler_params=pltpu.CompilerParams(
            dimension_semantics=("parallel",)),   # dual-TC split on v7x
    )(*args)
    return out.reshape(B, C)


def reference_forward(x, params, *, psize):
    """Pure-JAX reference matching the PyTorch forward (eval mode)."""
    w1c, b1, w2c, b2, w3c, b3, wd1, bd1, wd2, bd2 = params
    dn = ("NCH", "OIH", "NCH")
    hp = lax.Precision.HIGHEST

    h = x[:, None, :]                                            # unsqueeze(x, 1)
    h = lax.conv_general_dilated(h, w1c, (1,), "VALID",
                                 dimension_numbers=dn, precision=hp) + b1[None, :, None]
    h = jax.nn.relu(h)
    h = lax.conv_general_dilated(h, w2c, (1,), "VALID",
                                 dimension_numbers=dn, precision=hp) + b2[None, :, None]
    h = jax.nn.relu(h)
    h = lax.conv_general_dilated(h, w3c, (1,), "VALID",
                                 dimension_numbers=dn, precision=hp) + b3[None, :, None]
    h = jax.nn.relu(h)
    B, F, L3 = h.shape
    Lp = L3 // psize
    h = h[:, :, :Lp * psize].reshape(B, F, Lp, psize).max(axis=-1)   # MaxPool1d
    h = h.reshape(B, F * Lp)                                         # Flatten
    h = jax.nn.relu(jnp.matmul(h, wd1.T, precision=hp) + bd1)        # dense1 + relu
    logits = jnp.matmul(h, wd2.T, precision=hp) + bd2                # dense2
    return jax.nn.softmax(logits, axis=1)


if __name__ == "__main__":
    # Module hyper-parameters (cols must be 1 for the forward pass to typecheck,
    # since unsqueeze(x, 1) creates the channel dim of size 1).
    num_classes, rows, cols, nb_filters, psize, ksize = 5, 64, 1, 8, 2, 3
    B = 2
    F, K, K3, C = nb_filters, ksize, 6, num_classes
    flat = nb_filters * ((rows - (ksize - 1) * 2 - 5) // psize)      # dense1 in-features

    key = jax.random.PRNGKey(0)
    keys = jax.random.split(key, 11)

    def u(k, shape, fan_in):
        bound = 1.0 / np.sqrt(fan_in)
        return jax.random.uniform(k, shape, jnp.float32, -bound, bound)

    params = (
        u(keys[0], (F, cols, K), cols * K),      # conv1.weight
        u(keys[1], (F,), cols * K),              # conv1.bias
        u(keys[2], (F, F, K), F * K),            # conv2.weight
        u(keys[3], (F,), F * K),                 # conv2.bias
        u(keys[4], (F, F, K3), F * K3),          # conv3.weight
        u(keys[5], (F,), F * K3),                # conv3.bias
        u(keys[6], (64, flat), flat),            # dense1.weight
        u(keys[7], (64,), flat),                 # dense1.bias
        u(keys[8], (C, 64), 64),                 # dense2.weight
        u(keys[9], (C,), 64),                    # dense2.bias
    )
    x = jax.random.normal(keys[10], (B, rows), jnp.float32)

    out = tcpdump_forward(x, params, num_classes=C, rows=rows,
                          nb_filters=F, psize=psize, ksize=ksize)
    out = jax.block_until_ready(out)

    ref = reference_forward(x, params, psize=psize)
    assert out.shape == (B, C)
    np.testing.assert_allclose(np.asarray(out), np.asarray(ref), atol=2e-3, rtol=2e-3)
    assert np.allclose(np.asarray(out).sum(axis=1), 1.0, atol=1e-3)
    print("KERNEL_OK")
</pallas_src>

<mosaic_0001>
module attributes {stable_mosaic.version = 11 : i64} {
  func.func @kernel(%arg0: i32, %arg1: memref<1x1x64xf32, #tpu.memory_space<vmem>>, %arg2: memref<8x3xf32, #tpu.memory_space<vmem>>, %arg3: memref<8x1xf32, #tpu.memory_space<vmem>>, %arg4: memref<8x24xf32, #tpu.memory_space<vmem>>, %arg5: memref<8x1xf32, #tpu.memory_space<vmem>>, %arg6: memref<8x48xf32, #tpu.memory_space<vmem>>, %arg7: memref<8x1xf32, #tpu.memory_space<vmem>>, %arg8: memref<8x53x64xf32, #tpu.memory_space<vmem>>, %arg9: memref<1x64xf32, #tpu.memory_space<vmem>>, %arg10: memref<64x5xf32, #tpu.memory_space<vmem>>, %arg11: memref<1x5xf32, #tpu.memory_space<vmem>>, %arg12: memref<1x1x5xf32, #tpu.memory_space<vmem>>) attributes {dimension_semantics = [#tpu.dimension_semantics<parallel>], iteration_bounds = array<i64: 2>, scalar_prefetch = 0 : i64, scratch_operands = 0 : i64, tpu.core_type = #tpu.core_type<tc>, window_params = [{transform_indices = @transform_0, window_bounds = array<i64: 1, 1, 64>}, {pipeline_mode = #tpu.pipeline_mode<synchronous>, transform_indices = @transform_1, window_bounds = array<i64: 8, 3>}, {pipeline_mode = #tpu.pipeline_mode<synchronous>, transform_indices = @transform_2, window_bounds = array<i64: 8, 1>}, {pipeline_mode = #tpu.pipeline_mode<synchronous>, transform_indices = @transform_3, window_bounds = array<i64: 8, 24>}, {pipeline_mode = #tpu.pipeline_mode<synchronous>, transform_indices = @transform_4, window_bounds = array<i64: 8, 1>}, {pipeline_mode = #tpu.pipeline_mode<synchronous>, transform_indices = @transform_5, window_bounds = array<i64: 8, 48>}, {pipeline_mode = #tpu.pipeline_mode<synchronous>, transform_indices = @transform_6, window_bounds = array<i64: 8, 1>}, {pipeline_mode = #tpu.pipeline_mode<synchronous>, transform_indices = @transform_7, window_bounds = array<i64: 8, 53, 64>}, {pipeline_mode = #tpu.pipeline_mode<synchronous>, transform_indices = @transform_8, window_bounds = array<i64: 1, 64>}, {pipeline_mode = #tpu.pipeline_mode<synchronous>, transform_indices = @transform_9, window_bounds = array<i64: 64, 5>}, {pipeline_mode = #tpu.pipeline_mode<synchronous>, transform_indices = @transform_10, window_bounds = array<i64: 1, 5>}, {transform_indices = @transform_11, window_bounds = array<i64: 1, 1, 5>}]} {
    %c0 = arith.constant 0 : index
    %c0_0 = arith.constant 0 : index
    %c0_1 = arith.constant 0 : index
    %0 = vector.load %arg1[%c0, %c0_0, %c0_1] : memref<1x1x64xf32, #tpu.memory_space<vmem>>, vector<1x1x64xf32>
    %1 = vector.shape_cast %0 : vector<1x1x64xf32> to vector<1x64xf32>
    %2 = vector.extract_strided_slice %1 {offsets = [0, 0], sizes = [1, 62], strides = [1, 1]} : vector<1x64xf32> to vector<1x62xf32>
    %3 = vector.extract_strided_slice %1 {offsets = [0, 1], sizes = [1, 62], strides = [1, 1]} : vector<1x64xf32> to vector<1x62xf32>
    %4 = vector.extract_strided_slice %1 {offsets = [0, 2], sizes = [1, 62], strides = [1, 1]} : vector<1x64xf32> to vector<1x62xf32>
    %5 = tpu.concatenate %2, %3, %4 in 0 : vector<1x62xf32>, vector<1x62xf32>, vector<1x62xf32> -> vector<3x62xf32>
    %c0_2 = arith.constant 0 : index
    %c0_3 = arith.constant 0 : index
    %6 = vector.load %arg2[%c0_2, %c0_3] : memref<8x3xf32, #tpu.memory_space<vmem>>, vector<8x3xf32>
    %cst = arith.constant dense<0.000000e+00> : vector<8x62xf32>
    %7 = tpu.matmul %6, %5, %cst {dimension_numbers = #tpu.dot_dimension_numbers<[1], [0], [0], [1], [0, 0, 1, 1], [], []>} : vector<8x3xf32>, vector<3x62xf32>, vector<8x62xf32> -> vector<8x62xf32>
    %c0_4 = arith.constant 0 : index
    %c0_5 = arith.constant 0 : index
    %8 = vector.load %arg3[%c0_4, %c0_5] : memref<8x1xf32, #tpu.memory_space<vmem>>, vector<8x1xf32>
    %9 = vector.broadcast %8 : vector<8x1xf32> to vector<8x62xf32>
    %10 = arith.addf %7, %9 : vector<8x62xf32>
    %cst_6 = arith.constant 0.000000e+00 : f32
    %11 = vector.broadcast %cst_6 : f32 to vector<8x62xf32>
    %12 = arith.maximumf %10, %11 : vector<8x62xf32>
    %13 = vector.extract_strided_slice %12 {offsets = [0, 0], sizes = [8, 60], strides = [1, 1]} : vector<8x62xf32> to vector<8x60xf32>
    %14 = vector.extract_strided_slice %12 {offsets = [0, 1], sizes = [8, 60], strides = [1, 1]} : vector<8x62xf32> to vector<8x60xf32>
    %15 = vector.extract_strided_slice %12 {offsets = [0, 2], sizes = [8, 60], strides = [1, 1]} : vector<8x62xf32> to vector<8x60xf32>
    %16 = tpu.concatenate %13, %14, %15 in 0 : vector<8x60xf32>, vector<8x60xf32>, vector<8x60xf32> -> vector<24x60xf32>
    %c0_7 = arith.constant 0 : index
    %c0_8 = arith.constant 0 : index
    %17 = vector.load %arg4[%c0_7, %c0_8] : memref<8x24xf32, #tpu.memory_space<vmem>>, vector<8x24xf32>
    %cst_9 = arith.constant dense<0.000000e+00> : vector<8x60xf32>
    %18 = tpu.matmul %17, %16, %cst_9 {dimension_numbers = #tpu.dot_dimension_numbers<[1], [0], [0], [1], [0, 0, 1, 1], [], []>} : vector<8x24xf32>, vector<24x60xf32>, vector<8x60xf32> -> vector<8x60xf32>
    %c0_10 = arith.constant 0 : index
    %c0_11 = arith.constant 0 : index
    %19 = vector.load %arg5[%c0_10, %c0_11] : memref<8x1xf32, #tpu.memory_space<vmem>>, vector<8x1xf32>
    %20 = vector.broadcast %19 : vector<8x1xf32> to vector<8x60xf32>
    %21 = arith.addf %18, %20 : vector<8x60xf32>
    %cst_12 = arith.constant 0.000000e+00 : f32
    %22 = vector.broadcast %cst_12 : f32 to vector<8x60xf32>
    %23 = arith.maximumf %21, %22 : vector<8x60xf32>
    %24 = vector.extract_strided_slice %23 {offsets = [0, 0], sizes = [8, 55], strides = [1, 1]} : vector<8x60xf32> to vector<8x55xf32>
    %25 = vector.extract_strided_slice %23 {offsets = [0, 1], sizes = [8, 55], strides = [1, 1]} : vector<8x60xf32> to vector<8x55xf32>
    %26 = vector.extract_strided_slice %23 {offsets = [0, 2], sizes = [8, 55], strides = [1, 1]} : vector<8x60xf32> to vector<8x55xf32>
    %27 = vector.extract_strided_slice %23 {offsets = [0, 3], sizes = [8, 55], strides = [1, 1]} : vector<8x60xf32> to vector<8x55xf32>
    %28 = vector.extract_strided_slice %23 {offsets = [0, 4], sizes = [8, 55], strides = [1, 1]} : vector<8x60xf32> to vector<8x55xf32>
    %29 = vector.extract_strided_slice %23 {offsets = [0, 5], sizes = [8, 55], strides = [1, 1]} : vector<8x60xf32> to vector<8x55xf32>
    %30 = tpu.concatenate %24, %25, %26, %27, %28, %29 in 0 : vector<8x55xf32>, vector<8x55xf32>, vector<8x55xf32>, vector<8x55xf32>, vector<8x55xf32>, vector<8x55xf32> -> vector<48x55xf32>
    %c0_13 = arith.constant 0 : index
    %c0_14 = arith.constant 0 : index
    %31 = vector.load %arg6[%c0_13, %c0_14] : memref<8x48xf32, #tpu.memory_space<vmem>>, vector<8x48xf32>
    %cst_15 = arith.constant dense<0.000000e+00> : vector<8x55xf32>
    %32 = tpu.matmul %31, %30, %cst_15 {dimension_numbers = #tpu.dot_dimension_numbers<[1], [0], [0], [1], [0, 0, 1, 1], [], []>} : vector<8x48xf32>, vector<48x55xf32>, vector<8x55xf32> -> vector<8x55xf32>
    %c0_16 = arith.constant 0 : index
    %c0_17 = arith.constant 0 : index
    %33 = vector.load %arg7[%c0_16, %c0_17] : memref<8x1xf32, #tpu.memory_space<vmem>>, vector<8x1xf32>
    %34 = vector.broadcast %33 : vector<8x1xf32> to vector<8x55xf32>
    %35 = arith.addf %32, %34 : vector<8x55xf32>
    %cst_18 = arith.constant 0.000000e+00 : f32
    %36 = vector.broadcast %cst_18 : f32 to vector<8x55xf32>
    %37 = arith.maximumf %35, %36 : vector<8x55xf32>
    %38 = vector.extract_strided_slice %37 {offsets = [0, 0], sizes = [8, 53], strides = [1, 1]} : vector<8x55xf32> to vector<8x53xf32>
    %39 = vector.extract_strided_slice %37 {offsets = [0, 1], sizes = [8, 53], strides = [1, 1]} : vector<8x55xf32> to vector<8x53xf32>
    %40 = arith.maximumf %38, %39 : vector<8x53xf32>
    %c0_19 = arith.constant 0 : index
    %c0_20 = arith.constant 0 : index
    %41 = vector.load %arg9[%c0_19, %c0_20] : memref<1x64xf32, #tpu.memory_space<vmem>>, vector<1x64xf32>
    %42 = vector.extract_strided_slice %40 {offsets = [0, 0], sizes = [1, 53], strides = [1, 1]} : vector<8x53xf32> to vector<1x53xf32>
    %c0_21 = arith.constant 0 : index
    %c0_22 = arith.constant 0 : index
    %c0_23 = arith.constant 0 : index
    %43 = vector.load %arg8[%c0_21, %c0_22, %c0_23] : memref<8x53x64xf32, #tpu.memory_space<vmem>>, vector<1x53x64xf32>
    %44 = vector.shape_cast %43 : vector<1x53x64xf32> to vector<53x64xf32>
    %cst_24 = arith.constant dense<0.000000e+00> : vector<1x64xf32>
    %45 = tpu.matmul %42, %44, %cst_24 {dimension_numbers = #tpu.dot_dimension_numbers<[1], [0], [0], [1], [0, 0, 1, 1], [], []>} : vector<1x53xf32>, vector<53x64xf32>, vector<1x64xf32> -> vector<1x64xf32>
    %46 = arith.addf %41, %45 : vector<1x64xf32>
    %47 = vector.extract_strided_slice %40 {offsets = [1, 0], sizes = [1, 53], strides = [1, 1]} : vector<8x53xf32> to vector<1x53xf32>
    %c1 = arith.constant 1 : index
    %c0_25 = arith.constant 0 : index
    %c0_26 = arith.constant 0 : index
    %48 = vector.load %arg8[%c1, %c0_25, %c0_26] : memref<8x53x64xf32, #tpu.memory_space<vmem>>, vector<1x53x64xf32>
    %49 = vector.shape_cast %48 : vector<1x53x64xf32> to vector<53x64xf32>
    %cst_27 = arith.constant dense<0.000000e+00> : vector<1x64xf32>
    %50 = tpu.matmul %47, %49, %cst_27 {dimension_numbers = #tpu.dot_dimension_numbers<[1], [0], [0], [1], [0, 0, 1, 1], [], []>} : vector<1x53xf32>, vector<53x64xf32>, vector<1x64xf32> -> vector<1x64xf32>
    %51 = arith.addf %46, %50 : vector<1x64xf32>
    %52 = vector.extract_strided_slice %40 {offsets = [2, 0], sizes = [1, 53], strides = [1, 1]} : vector<8x53xf32> to vector<1x53xf32>
    %c2 = arith.constant 2 : index
    %c0_28 = arith.constant 0 : index
    %c0_29 = arith.constant 0 : index
    %53 = vector.load %arg8[%c2, %c0_28, %c0_29] : memref<8x53x64xf32, #tpu.memory_space<vmem>>, vector<1x53x64xf32>
    %54 = vector.shape_cast %53 : vector<1x53x64xf32> to vector<53x64xf32>
    %cst_30 = arith.constant dense<0.000000e+00> : vector<1x64xf32>
    %55 = tpu.matmul %52, %54, %cst_30 {dimension_numbers = #tpu.dot_dimension_numbers<[1], [0], [0], [1], [0, 0, 1, 1], [], []>} : vector<1x53xf32>, vector<53x64xf32>, vector<1x64xf32> -> vector<1x64xf32>
    %56 = arith.addf %51, %55 : vector<1x64xf32>
    %57 = vector.extract_strided_slice %40 {offsets = [3, 0], sizes = [1, 53], strides = [1, 1]} : vector<8x53xf32> to vector<1x53xf32>
    %c3 = arith.constant 3 : index
    %c0_31 = arith.constant 0 : index
    %c0_32 = arith.constant 0 : index
    %58 = vector.load %arg8[%c3, %c0_31, %c0_32] : memref<8x53x64xf32, #tpu.memory_space<vmem>>, vector<1x53x64xf32>
    %59 = vector.shape_cast %58 : vector<1x53x64xf32> to vector<53x64xf32>
    %cst_33 = arith.constant dense<0.000000e+00> : vector<1x64xf32>
    %60 = tpu.matmul %57, %59, %cst_33 {dimension_numbers = #tpu.dot_dimension_numbers<[1], [0], [0], [1], [0, 0, 1, 1], [], []>} : vector<1x53xf32>, vector<53x64xf32>, vector<1x64xf32> -> vector<1x64xf32>
    %61 = arith.addf %56, %60 : vector<1x64xf32>
    %62 = vector.extract_strided_slice %40 {offsets = [4, 0], sizes = [1, 53], strides = [1, 1]} : vector<8x53xf32> to vector<1x53xf32>
    %c4 = arith.constant 4 : index
    %c0_34 = arith.constant 0 : index
    %c0_35 = arith.constant 0 : index
    %63 = vector.load %arg8[%c4, %c0_34, %c0_35] : memref<8x53x64xf32, #tpu.memory_space<vmem>>, vector<1x53x64xf32>
    %64 = vector.shape_cast %63 : vector<1x53x64xf32> to vector<53x64xf32>
    %cst_36 = arith.constant dense<0.000000e+00> : vector<1x64xf32>
    %65 = tpu.matmul %62, %64, %cst_36 {dimension_numbers = #tpu.dot_dimension_numbers<[1], [0], [0], [1], [0, 0, 1, 1], [], []>} : vector<1x53xf32>, vector<53x64xf32>, vector<1x64xf32> -> vector<1x64xf32>
    %66 = arith.addf %61, %65 : vector<1x64xf32>
    %67 = vector.extract_strided_slice %40 {offsets = [5, 0], sizes = [1, 53], strides = [1, 1]} : vector<8x53xf32> to vector<1x53xf32>
    %c5 = arith.constant 5 : index
    %c0_37 = arith.constant 0 : index
    %c0_38 = arith.constant 0 : index
    %68 = vector.load %arg8[%c5, %c0_37, %c0_38] : memref<8x53x64xf32, #tpu.memory_space<vmem>>, vector<1x53x64xf32>
    %69 = vector.shape_cast %68 : vector<1x53x64xf32> to vector<53x64xf32>
    %cst_39 = arith.constant dense<0.000000e+00> : vector<1x64xf32>
    %70 = tpu.matmul %67, %69, %cst_39 {dimension_numbers = #tpu.dot_dimension_numbers<[1], [0], [0], [1], [0, 0, 1, 1], [], []>} : vector<1x53xf32>, vector<53x64xf32>, vector<1x64xf32> -> vector<1x64xf32>
    %71 = arith.addf %66, %70 : vector<1x64xf32>
    %72 = vector.extract_strided_slice %40 {offsets = [6, 0], sizes = [1, 53], strides = [1, 1]} : vector<8x53xf32> to vector<1x53xf32>
    %c6 = arith.constant 6 : index
    %c0_40 = arith.constant 0 : index
    %c0_41 = arith.constant 0 : index
    %73 = vector.load %arg8[%c6, %c0_40, %c0_41] : memref<8x53x64xf32, #tpu.memory_space<vmem>>, vector<1x53x64xf32>
    %74 = vector.shape_cast %73 : vector<1x53x64xf32> to vector<53x64xf32>
    %cst_42 = arith.constant dense<0.000000e+00> : vector<1x64xf32>
    %75 = tpu.matmul %72, %74, %cst_42 {dimension_numbers = #tpu.dot_dimension_numbers<[1], [0], [0], [1], [0, 0, 1, 1], [], []>} : vector<1x53xf32>, vector<53x64xf32>, vector<1x64xf32> -> vector<1x64xf32>
    %76 = arith.addf %71, %75 : vector<1x64xf32>
    %77 = vector.extract_strided_slice %40 {offsets = [7, 0], sizes = [1, 53], strides = [1, 1]} : vector<8x53xf32> to vector<1x53xf32>
    %c7 = arith.constant 7 : index
    %c0_43 = arith.constant 0 : index
    %c0_44 = arith.constant 0 : index
    %78 = vector.load %arg8[%c7, %c0_43, %c0_44] : memref<8x53x64xf32, #tpu.memory_space<vmem>>, vector<1x53x64xf32>
    %79 = vector.shape_cast %78 : vector<1x53x64xf32> to vector<53x64xf32>
    %cst_45 = arith.constant dense<0.000000e+00> : vector<1x64xf32>
    %80 = tpu.matmul %77, %79, %cst_45 {dimension_numbers = #tpu.dot_dimension_numbers<[1], [0], [0], [1], [0, 0, 1, 1], [], []>} : vector<1x53xf32>, vector<53x64xf32>, vector<1x64xf32> -> vector<1x64xf32>
    %81 = arith.addf %76, %80 : vector<1x64xf32>
    %cst_46 = arith.constant 0.000000e+00 : f32
    %82 = vector.broadcast %cst_46 : f32 to vector<1x64xf32>
    %83 = arith.maximumf %81, %82 : vector<1x64xf32>
    %c0_47 = arith.constant 0 : index
    %c0_48 = arith.constant 0 : index
    %84 = vector.load %arg10[%c0_47, %c0_48] : memref<64x5xf32, #tpu.memory_space<vmem>>, vector<64x5xf32>
    %cst_49 = arith.constant dense<0.000000e+00> : vector<1x5xf32>
    %85 = tpu.matmul %83, %84, %cst_49 {dimension_numbers = #tpu.dot_dimension_numbers<[1], [0], [0], [1], [0, 0, 1, 1], [], []>} : vector<1x64xf32>, vector<64x5xf32>, vector<1x5xf32> -> vector<1x5xf32>
    %c0_50 = arith.constant 0 : index
    %c0_51 = arith.constant 0 : index
    %86 = vector.load %arg11[%c0_50, %c0_51] : memref<1x5xf32, #tpu.memory_space<vmem>>, vector<1x5xf32>
    %87 = arith.addf %85, %86 : vector<1x5xf32>
    %cst_52 = arith.constant dense<0xFF800000> : vector<1xf32>
    %88 = vector.multi_reduction <maximumf>, %87, %cst_52 [1] : vector<1x5xf32> to vector<1xf32>
    %89 = vector.shape_cast %88 : vector<1xf32> to vector<1x1xf32>
    %90 = vector.broadcast %89 : vector<1x1xf32> to vector<1x5xf32>
    %91 = arith.subf %87, %90 : vector<1x5xf32>
    %92 = math.exp %91 : vector<1x5xf32>
    %cst_53 = arith.constant dense<0.000000e+00> : vector<1xf32>
    %93 = vector.multi_reduction <add>, %92, %cst_53 [1] : vector<1x5xf32> to vector<1xf32>
    %94 = vector.shape_cast %93 : vector<1xf32> to vector<1x1xf32>
    %95 = tpu.reciprocal %94 {approx = true} : vector<1x1xf32> -> vector<1x1xf32>
    %96 = arith.mulf %94, %95 : vector<1x1xf32>
    %cst_54 = arith.constant 2.000000e+00 : f32
    %97 = vector.broadcast %cst_54 : f32 to vector<1x1xf32>
    %98 = arith.subf %97, %96 : vector<1x1xf32>
    %99 = arith.mulf %95, %98 : vector<1x1xf32>
    %100 = vector.broadcast %99 : vector<1x1xf32> to vector<1x5xf32>
    %101 = arith.mulf %92, %100 : vector<1x5xf32>
    %c0_55 = arith.constant 0 : index
    %c0_56 = arith.constant 0 : index
    %c0_57 = arith.constant 0 : index
    %102 = vector.load %arg12[%c0_55, %c0_56, %c0_57] : memref<1x1x5xf32, #tpu.memory_space<vmem>>, vector<1x1x5xf32>
    %103 = vector.shape_cast %102 : vector<1x1x5xf32> to vector<1x5xf32>
    %104 = vector.shape_cast %101 : vector<1x5xf32> to vector<1x1x5xf32>
    tpu.vector_store %arg12[%c0_55, %c0_56, %c0_57], %104 {strides = array<i32>} : memref<1x1x5xf32, #tpu.memory_space<vmem>>, vector<1x1x5xf32>,
    return
  }
  func.func @transform_0(%arg0: i32) -> (i32, i32, i32) {
    %c0_i32 = arith.constant 0 : i32
    %c0_i32_0 = arith.constant 0 : i32
    %c0_i32_1 = arith.constant 0 : i32
    return %arg0, %c0_i32, %c0_i32_0 : i32, i32, i32
  }
  func.func @transform_1(%arg0: i32) -> (i32, i32) {
    %c0_i32 = arith.constant 0 : i32
    %c0_i32_0 = arith.constant 0 : i32
    %c0_i32_1 = arith.constant 0 : i32
    return %c0_i32, %c0_i32_0 : i32, i32
  }
  func.func @transform_2(%arg0: i32) -> (i32, i32) {
    %c0_i32 = arith.constant 0 : i32
    %c0_i32_0 = arith.constant 0 : i32
    %c0_i32_1 = arith.constant 0 : i32
    return %c0_i32, %c0_i32_0 : i32, i32
  }
  func.func @transform_3(%arg0: i32) -> (i32, i32) {
    %c0_i32 = arith.constant 0 : i32
    %c0_i32_0 = arith.constant 0 : i32
    %c0_i32_1 = arith.constant 0 : i32
    return %c0_i32, %c0_i32_0 : i32, i32
  }
  func.func @transform_4(%arg0: i32) -> (i32, i32) {
    %c0_i32 = arith.constant 0 : i32
    %c0_i32_0 = arith.constant 0 : i32
    %c0_i32_1 = arith.constant 0 : i32
    return %c0_i32, %c0_i32_0 : i32, i32
  }
  func.func @transform_5(%arg0: i32) -> (i32, i32) {
    %c0_i32 = arith.constant 0 : i32
    %c0_i32_0 = arith.constant 0 : i32
    %c0_i32_1 = arith.constant 0 : i32
    return %c0_i32, %c0_i32_0 : i32, i32
  }
  func.func @transform_6(%arg0: i32) -> (i32, i32) {
    %c0_i32 = arith.constant 0 : i32
    %c0_i32_0 = arith.constant 0 : i32
    %c0_i32_1 = arith.constant 0 : i32
    return %c0_i32, %c0_i32_0 : i32, i32
  }
  func.func @transform_7(%arg0: i32) -> (i32, i32, i32) {
    %c0_i32 = arith.constant 0 : i32
    %c0_i32_0 = arith.constant 0 : i32
    %c0_i32_1 = arith.constant 0 : i32
    %c0_i32_2 = arith.constant 0 : i32
    return %c0_i32, %c0_i32_0, %c0_i32_1 : i32, i32, i32
  }
  func.func @transform_8(%arg0: i32) -> (i32, i32) {
    %c0_i32 = arith.constant 0 : i32
    %c0_i32_0 = arith.constant 0 : i32
    %c0_i32_1 = arith.constant 0 : i32
    return %c0_i32, %c0_i32_0 : i32, i32
  }
  func.func @transform_9(%arg0: i32) -> (i32, i32) {
    %c0_i32 = arith.constant 0 : i32
    %c0_i32_0 = arith.constant 0 : i32
    %c0_i32_1 = arith.constant 0 : i32
    return %c0_i32, %c0_i32_0 : i32, i32
  }
  func.func @transform_10(%arg0: i32) -> (i32, i32) {
    %c0_i32 = arith.constant 0 : i32
    %c0_i32_0 = arith.constant 0 : i32
    %c0_i32_1 = arith.constant 0 : i32
    return %c0_i32, %c0_i32_0 : i32, i32
  }
  func.func @transform_11(%arg0: i32) -> (i32, i32, i32) {
    %c0_i32 = arith.constant 0 : i32
    %c0_i32_0 = arith.constant 0 : i32
    %c0_i32_1 = arith.constant 0 : i32
    return %arg0, %c0_i32, %c0_i32_0 : i32, i32, i32
  }
}

</mosaic_0001>

<llo_original>
// kernel: tpu_custom_call.1
$region0: #{tpu_custom_call.1}
  #allocation0 [shape = 'u32[]', space=smem, size = 0x4, offset = 0x4, fixed_abs, tag = 'smem constant byte address 0x4 - core index']
  #allocation1 [shape = 'u32[72,128]{1,0:T(1,128)}', space=vmem, size = 0x9000, scoped, tag = 'internal scratch']
  %s0 = inlined_call_operand.vmem [shape: f32[2,1,64], index: 0, kind: input, shape index: {}]
  %s1 = inlined_call_operand.vmem [shape: f32[8,3], index: 1, kind: input, shape index: {}]
  %s2 = inlined_call_operand.vmem [shape: f32[8,1], index: 2, kind: input, shape index: {}]
  %s3 = inlined_call_operand.vmem [shape: f32[8,24], index: 3, kind: input, shape index: {}]
  %s4 = inlined_call_operand.vmem [shape: f32[8,1], index: 4, kind: input, shape index: {}]
  %s5 = inlined_call_operand.vmem [shape: f32[8,48], index: 5, kind: input, shape index: {}]
  %s6 = inlined_call_operand.vmem [shape: f32[8,1], index: 6, kind: input, shape index: {}]
  %s7 = inlined_call_operand.vmem [shape: f32[8,53,64], index: 7, kind: input, shape index: {}]
  %s8 = inlined_call_operand.vmem [shape: f32[1,64], index: 8, kind: input, shape index: {}]
  %s9 = inlined_call_operand.vmem [shape: f32[64,5], index: 9, kind: input, shape index: {}]
  %s10 = inlined_call_operand.vmem [shape: f32[1,5], index: 10, kind: input, shape index: {}]
  %s11 = inlined_call_operand.hbm [shape: f32[2,1,5], index: 11, kind: output, shape index: {}]
  %s12 = sld [smem:[#allocation0]]
  $region77: #{tpu_custom_call.1} parent=0
    _
  %s14 = ssub.s32 1, %s12
  %s15 = scalar_select 0, %s14, %s12
  $region1: #{tpu_custom_call.1} parent=0
    #allocation2 [shape = 'u8[1024]{0}', space=vmem, size = 0x400, scoped, tag = 'output window, operand 0']
    #allocation3 [shape = 's32[2]{0}', space=sflag, size = 0x8, scoped, tag = 'scoped memory for tpu_custom_call.1']
    %16 = vsyncpa [#allocation3], 0
    %s17 = scalar_lea.sflag [#allocation3], 1
    %18 = vsyncpa %s17, 0
    loop: start=0, step=1, limit=4
    $region2: #{tpu_custom_call.1} parent=1 // loop_pre_header
      _
    $region3: #{tpu_custom_call.1} parent=1 // loop_header
      %s20 = sphi 0, %s24
      %p21 = scmp.ge.s32.totalorder %s20, 4
      %s30 = sphi 0, %s32
      %s33 = sphi 0, %s30
      %s34 = sphi 0, %s33
      %s50 = sphi 0, %s34
      %s54 = sphi 0, %s54
      %s56 = sphi 0, %s54
      %s57 = sphi 0, %s56
      %s71 = sphi 0, %s57
      %s75 = sphi 0, %s75
      %s77 = sphi 0, %s75
      %s78 = sphi 0, %s77
      %s92 = sphi 0, %s78
      %s96 = sphi 0, %s96
      %s98 = sphi 0, %s96
      %s99 = sphi 0, %s98
      %s113 = sphi 0, %s99
      %s117 = sphi 0, %s117
      %s119 = sphi 0, %s117
      %s120 = sphi 0, %s119
      %s134 = sphi 0, %s120
      %s138 = sphi 0, %s138
      %s140 = sphi 0, %s138
      %s141 = sphi 0, %s140
      %s155 = sphi 0, %s141
      %s159 = sphi 0, %s159
      %s161 = sphi 0, %s159
      %s162 = sphi 0, %s161
      %s176 = sphi 0, %s162
      %s180 = sphi 0, %s180
      %s182 = sphi 0, %s180
      %s183 = sphi 0, %s182
      %s197 = sphi 0, %s183
      %s201 = sphi 0, %s201
      %s203 = sphi 0, %s201
      %s204 = sphi 0, %s203
      %s218 = sphi 0, %s204
      %s222 = sphi 0, %s222
      %s224 = sphi 0, %s222
      %s225 = sphi 0, %s224
      %s239 = sphi 0, %s225
      %s243 = sphi 0, %s243
      %s245 = sphi 0, %s243
      %s246 = sphi 0, %s245
      %s260 = sphi 0, %s246
      %s266 = sphi 0, %s268
      %s269 = sphi 0, %s266
      %s270 = sphi 0, %s269
      %s286 = sphi 0, %s270
    $region4: #{tpu_custom_call.1} parent=1 // loop_header_branch
      %23 = sbr.rel (%p21) target = $region8
    $region5: #{tpu_custom_call.1} parent=1 // loop_body
      %s25 = ssub.s32 %s20, 1
      %s26 = ssub.s32 %s20, 2
      %s27 = sadd.s32 %s20, 1
      %s28 = ssub.s32 %s20, %s27
      %p29 = scmp.eq.s32.totalorder %s28, 0
      %s31 = sadd.s32 %s30, 1
      %s32 = scalar_select %p29, %s30, %s31
      %p35 = pneg %p29
      %p36 = scmp.eq.s32.totalorder %s20, 1
      %p37 = por %p35, %p36
      %p38 = scmp.ne.s32.totalorder %s30, %s33
      %p39 = scmp.eq.s32.totalorder %s20, 0
      %p40 = por %p38, %p39
      %p41 = scmp.ne.s32.totalorder %s30, %s33
      %p42 = scmp.eq.s32.totalorder %s25, 1
      %p43 = por %p41, %p42
      %p44 = scmp.ne.s32.totalorder %s33, %s34
      %p45 = scmp.eq.s32.totalorder %s25, 0
      %p46 = por %p44, %p45
      %p47 = scmp.ne.s32.totalorder %s33, %s34
      %p48 = scmp.eq.s32.totalorder %s26, 1
      %p49 = por %p47, %p48
      %p51 = scmp.ne.s32.totalorder %s34, %s50
      %p52 = scmp.eq.s32.totalorder %s26, 0
      %p53 = por %p51, %p52
      %s55 = sadd.s32 %s54, 1
      %p58 = scmp.eq.s32.totalorder %s20, 1
      %p59 = scmp.ne.s32.totalorder %s54, %s56
      %p60 = scmp.eq.s32.totalorder %s20, 0
      %p61 = por %p59, %p60
      %p62 = scmp.ne.s32.totalorder %s54, %s56
      %p63 = scmp.eq.s32.totalorder %s25, 1
      %p64 = por %p62, %p63
      %p65 = scmp.ne.s32.totalorder %s56, %s57
      %p66 = scmp.eq.s32.totalorder %s25, 0
      %p67 = por %p65, %p66
      %p68 = scmp.ne.s32.totalorder %s56, %s57
      %p69 = scmp.eq.s32.totalorder %s26, 1
      %p70 = por %p68, %p69
      %p72 = scmp.ne.s32.totalorder %s57, %s71
      %p73 = scmp.eq.s32.totalorder %s26, 0
      %p74 = por %p72, %p73
      %s76 = sadd.s32 %s75, 1
      %p79 = scmp.eq.s32.totalorder %s20, 1
      %p80 = scmp.ne.s32.totalorder %s75, %s77
      %p81 = scmp.eq.s32.totalorder %s20, 0
      %p82 = por %p80, %p81
      %p83 = scmp.ne.s32.totalorder %s75, %s77
      %p84 = scmp.eq.s32.totalorder %s25, 1
      %p85 = por %p83, %p84
      %p86 = scmp.ne.s32.totalorder %s77, %s78
      %p87 = scmp.eq.s32.totalorder %s25, 0
      %p88 = por %p86, %p87
      %p89 = scmp.ne.s32.totalorder %s77, %s78
      %p90 = scmp.eq.s32.totalorder %s26, 1
      %p91 = por %p89, %p90
      %p93 = scmp.ne.s32.totalorder %s78, %s92
      %p94 = scmp.eq.s32.totalorder %s26, 0
      %p95 = por %p93, %p94
      %s97 = sadd.s32 %s96, 1
      %p100 = scmp.eq.s32.totalorder %s20, 1
      %p101 = scmp.ne.s32.totalorder %s96, %s98
      %p102 = scmp.eq.s32.totalorder %s20, 0
      %p103 = por %p101, %p102
      %p104 = scmp.ne.s32.totalorder %s96, %s98
      %p105 = scmp.eq.s32.totalorder %s25, 1
      %p106 = por %p104, %p105
      %p107 = scmp.ne.s32.totalorder %s98, %s99
      %p108 = scmp.eq.s32.totalorder %s25, 0
      %p109 = por %p107, %p108
      %p110 = scmp.ne.s32.totalorder %s98, %s99
      %p111 = scmp.eq.s32.totalorder %s26, 1
      %p112 = por %p110, %p111
      %p114 = scmp.ne.s32.totalorder %s99, %s113
      %p115 = scmp.eq.s32.totalorder %s26, 0
      %p116 = por %p114, %p115
      %s118 = sadd.s32 %s117, 1
      %p121 = scmp.eq.s32.totalorder %s20, 1
      %p122 = scmp.ne.s32.totalorder %s117, %s119
      %p123 = scmp.eq.s32.totalorder %s20, 0
      %p124 = por %p122, %p123
      %p125 = scmp.ne.s32.totalorder %s117, %s119
      %p126 = scmp.eq.s32.totalorder %s25, 1
      %p127 = por %p125, %p126
      %p128 = scmp.ne.s32.totalorder %s119, %s120
      %p129 = scmp.eq.s32.totalorder %s25, 0
      %p130 = por %p128, %p129
      %p131 = scmp.ne.s32.totalorder %s119, %s120
      %p132 = scmp.eq.s32.totalorder %s26, 1
      %p133 = por %p131, %p132
      %p135 = scmp.ne.s32.totalorder %s120, %s134
      %p136 = scmp.eq.s32.totalorder %s26, 0
      %p137 = por %p135, %p136
      %s139 = sadd.s32 %s138, 1
      %p142 = scmp.eq.s32.totalorder %s20, 1
      %p143 = scmp.ne.s32.totalorder %s138, %s140
      %p144 = scmp.eq.s32.totalorder %s20, 0
      %p145 = por %p143, %p144
      %p146 = scmp.ne.s32.totalorder %s138, %s140
      %p147 = scmp.eq.s32.totalorder %s25, 1
      %p148 = por %p146, %p147
      %p149 = scmp.ne.s32.totalorder %s140, %s141
      %p150 = scmp.eq.s32.totalorder %s25, 0
      %p151 = por %p149, %p150
      %p152 = scmp.ne.s32.totalorder %s140, %s141
      %p153 = scmp.eq.s32.totalorder %s26, 1
      %p154 = por %p152, %p153
      %p156 = scmp.ne.s32.totalorder %s141, %s155
      %p157 = scmp.eq.s32.totalorder %s26, 0
      %p158 = por %p156, %p157
      %s160 = sadd.s32 %s159, 1
      %p163 = scmp.eq.s32.totalorder %s20, 1
      %p164 = scmp.ne.s32.totalorder %s159, %s161
      %p165 = scmp.eq.s32.totalorder %s20, 0
      %p166 = por %p164, %p165
      %p167 = scmp.ne.s32.totalorder %s159, %s161
      %p168 = scmp.eq.s32.totalorder %s25, 1
      %p169 = por %p167, %p168
      %p170 = scmp.ne.s32.totalorder %s161, %s162
      %p171 = scmp.eq.s32.totalorder %s25, 0
      %p172 = por %p170, %p171
      %p173 = scmp.ne.s32.totalorder %s161, %s162
      %p174 = scmp.eq.s32.totalorder %s26, 1
      %p175 = por %p173, %p174
      %p177 = scmp.ne.s32.totalorder %s162, %s176
      %p178 = scmp.eq.s32.totalorder %s26, 0
      %p179 = por %p177, %p178
      %s181 = sadd.s32 %s180, 1
      %p184 = scmp.eq.s32.totalorder %s20, 1
      %p185 = scmp.ne.s32.totalorder %s180, %s182
      %p186 = scmp.eq.s32.totalorder %s20, 0
      %p187 = por %p185, %p186
      %p188 = scmp.ne.s32.totalorder %s180, %s182
      %p189 = scmp.eq.s32.totalorder %s25, 1
      %p190 = por %p188, %p189
      %p191 = scmp.ne.s32.totalorder %s182, %s183
      %p192 = scmp.eq.s32.totalorder %s25, 0
      %p193 = por %p191, %p192
      %p194 = scmp.ne.s32.totalorder %s182, %s183
      %p195 = scmp.eq.s32.totalorder %s26, 1
      %p196 = por %p194, %p195
      %p198 = scmp.ne.s32.totalorder %s183, %s197
      %p199 = scmp.eq.s32.totalorder %s26, 0
      %p200 = por %p198, %p199
      %s202 = sadd.s32 %s201, 1
      %p205 = scmp.eq.s32.totalorder %s20, 1
      %p206 = scmp.ne.s32.totalorder %s201, %s203
      %p207 = scmp.eq.s32.totalorder %s20, 0
      %p208 = por %p206, %p207
      %p209 = scmp.ne.s32.totalorder %s201, %s203
      %p210 = scmp.eq.s32.totalorder %s25, 1
      %p211 = por %p209, %p210
      %p212 = scmp.ne.s32.totalorder %s203, %s204
      %p213 = scmp.eq.s32.totalorder %s25, 0
      %p214 = por %p212, %p213
      %p215 = scmp.ne.s32.totalorder %s203, %s204
      %p216 = scmp.eq.s32.totalorder %s26, 1
      %p217 = por %p215, %p216
      %p219 = scmp.ne.s32.totalorder %s204, %s218
      %p220 = scmp.eq.s32.totalorder %s26, 0
      %p221 = por %p219, %p220
      %s223 = sadd.s32 %s222, 1
      %p226 = scmp.eq.s32.totalorder %s20, 1
      %p227 = scmp.ne.s32.totalorder %s222, %s224
      %p228 = scmp.eq.s32.totalorder %s20, 0
      %p229 = por %p227, %p228
      %p230 = scmp.ne.s32.totalorder %s222, %s224
      %p231 = scmp.eq.s32.totalorder %s25, 1
      %p232 = por %p230, %p231
      %p233 = scmp.ne.s32.totalorder %s224, %s225
      %p234 = scmp.eq.s32.totalorder %s25, 0
      %p235 = por %p233, %p234
      %p236 = scmp.ne.s32.totalorder %s224, %s225
      %p237 = scmp.eq.s32.totalorder %s26, 1
      %p238 = por %p236, %p237
      %p240 = scmp.ne.s32.totalorder %s225, %s239
      %p241 = scmp.eq.s32.totalorder %s26, 0
      %p242 = por %p240, %p241
      %s244 = sadd.s32 %s243, 1
      %p247 = scmp.eq.s32.totalorder %s20, 1
      %p248 = scmp.ne.s32.totalorder %s243, %s245
      %p249 = scmp.eq.s32.totalorder %s20, 0
      %p250 = por %p248, %p249
      %p251 = scmp.ne.s32.totalorder %s243, %s245
      %p252 = scmp.eq.s32.totalorder %s25, 1
      %p253 = por %p251, %p252
      %p254 = scmp.ne.s32.totalorder %s245, %s246
      %p255 = scmp.eq.s32.totalorder %s25, 0
      %p256 = por %p254, %p255
      %p257 = scmp.ne.s32.totalorder %s245, %s246
      %p258 = scmp.eq.s32.totalorder %s26, 1
      %p259 = por %p257, %p258
      %p261 = scmp.ne.s32.totalorder %s246, %s260
      %p262 = scmp.eq.s32.totalorder %s26, 0
      %p263 = por %p261, %p262
      %s264 = ssub.s32 %s20, %s27
      %p265 = scmp.eq.s32.totalorder %s264, 0
      %s267 = sadd.s32 %s266, 1
      %s268 = scalar_select %p265, %s266, %s267
      %p271 = pneg %p265
      %p272 = scmp.eq.s32.totalorder %s20, 1
      %p273 = por %p271, %p272
      %p274 = scmp.ne.s32.totalorder %s266, %s269
      %p275 = scmp.eq.s32.totalorder %s20, 0
      %p276 = por %p274, %p275
      %p277 = scmp.ne.s32.totalorder %s266, %s269
      %p278 = scmp.eq.s32.totalorder %s25, 1
      %p279 = por %p277, %p278
      %p280 = scmp.ne.s32.totalorder %s269, %s270
      %p281 = scmp.eq.s32.totalorder %s25, 0
      %p282 = por %p280, %p281
      %p283 = scmp.ne.s32.totalorder %s269, %s270
      %p284 = scmp.eq.s32.totalorder %s26, 1
      %p285 = por %p283, %p284
      %p287 = scmp.ne.s32.totalorder %s270, %s286
      %p288 = scmp.eq.s32.totalorder %s26, 0
      %p289 = por %p287, %p288
      %p290 = scmp.le.s32.totalorder 1, %s20
      %p291 = scmp.lt.s32.totalorder %s20, 3
      %p292 = pnand %p290, %p291
      %p293 = pneg %p292
      // Predicated region
      $region9: #{tpu_custom_call.1} parent=5 // pred_check
        _
      $region10: #{tpu_custom_call.1} parent=5 // pred_check_branch
        %295 = sbr.rel (%p292) target = $region12
      $region11: #{tpu_custom_call.1} parent=5 // pred_region
        %s296 = ssub.s32 %s20, 1
        // Predicated region
        $region13: #{tpu_custom_call.1} parent=11 // pred_check
          %p297 = pneg %p67
        $region14: #{tpu_custom_call.1} parent=11 // pred_check_branch
          %299 = sbr.rel (%p297) target = $region16
        $region15: #{tpu_custom_call.1} parent=11 // pred_region
          _
        $region16: #{tpu_custom_call.1} parent=11 // pred_fallthru
          _
        // Predicated region
        $region17: #{tpu_custom_call.1} parent=11 // pred_check
          %p300 = pneg %p88
        $region18: #{tpu_custom_call.1} parent=11 // pred_check_branch
          %302 = sbr.rel (%p300) target = $region20
        $region19: #{tpu_custom_call.1} parent=11 // pred_region
          _
        $region20: #{tpu_custom_call.1} parent=11 // pred_fallthru
          _
        // Predicated region
        $region21: #{tpu_custom_call.1} parent=11 // pred_check
          %p303 = pneg %p109
        $region22: #{tpu_custom_call.1} parent=11 // pred_check_branch
          %305 = sbr.rel (%p303) target = $region24
        $region23: #{tpu_custom_call.1} parent=11 // pred_region
          _
        $region24: #{tpu_custom_call.1} parent=11 // pred_fallthru
          _
        // Predicated region
        $region25: #{tpu_custom_call.1} parent=11 // pred_check
          %p306 = pneg %p130
        $region26: #{tpu_custom_call.1} parent=11 // pred_check_branch
          %308 = sbr.rel (%p306) target = $region28
        $region27: #{tpu_custom_call.1} parent=11 // pred_region
          _
        $region28: #{tpu_custom_call.1} parent=11 // pred_fallthru
          _
        // Predicated region
        $region29: #{tpu_custom_call.1} parent=11 // pred_check
          %p309 = pneg %p151
        $region30: #{tpu_custom_call.1} parent=11 // pred_check_branch
          %311 = sbr.rel (%p309) target = $region32
        $region31: #{tpu_custom_call.1} parent=11 // pred_region
          _
        $region32: #{tpu_custom_call.1} parent=11 // pred_fallthru
          _
        // Predicated region
        $region33: #{tpu_custom_call.1} parent=11 // pred_check
          %p312 = pneg %p172
        $region34: #{tpu_custom_call.1} parent=11 // pred_check_branch
          %314 = sbr.rel (%p312) target = $region36
        $region35: #{tpu_custom_call.1} parent=11 // pred_region
          _
        $region36: #{tpu_custom_call.1} parent=11 // pred_fallthru
          _
        // Predicated region
        $region37: #{tpu_custom_call.1} parent=11 // pred_check
          %p315 = pneg %p193
        $region38: #{tpu_custom_call.1} parent=11 // pred_check_branch
          %317 = sbr.rel (%p315) target = $region40
        $region39: #{tpu_custom_call.1} parent=11 // pred_region
          _
        $region40: #{tpu_custom_call.1} parent=11 // pred_fallthru
          _
        // Predicated region
        $region41: #{tpu_custom_call.1} parent=11 // pred_check
          %p318 = pneg %p214
        $region42: #{tpu_custom_call.1} parent=11 // pred_check_branch
          %320 = sbr.rel (%p318) target = $region44
        $region43: #{tpu_custom_call.1} parent=11 // pred_region
          _
        $region44: #{tpu_custom_call.1} parent=11 // pred_fallthru
          _
        // Predicated region
        $region45: #{tpu_custom_call.1} parent=11 // pred_check
          %p321 = pneg %p235
        $region46: #{tpu_custom_call.1} parent=11 // pred_check_branch
          %323 = sbr.rel (%p321) target = $region48
        $region47: #{tpu_custom_call.1} parent=11 // pred_region
          _
        $region48: #{tpu_custom_call.1} parent=11 // pred_fallthru
          _
        // Predicated region
        $region49: #{tpu_custom_call.1} parent=11 // pred_check
          %p324 = pneg %p256
        $region50: #{tpu_custom_call.1} parent=11 // pred_check_branch
          %326 = sbr.rel (%p324) target = $region52
        $region51: #{tpu_custom_call.1} parent=11 // pred_region
          _
        $region52: #{tpu_custom_call.1} parent=11 // pred_fallthru
          _
      $region12: #{tpu_custom_call.1} parent=5 // pred_fallthru
        _
      %p327 = scmp.lt.s32.totalorder %s20, 2
      // Predicated region
      $region53: #{tpu_custom_call.1} parent=5 // pred_check
        %p328 = pneg %p327
      $region54: #{tpu_custom_call.1} parent=5 // pred_check_branch
        %330 = sbr.rel (%p328) target = $region56
      $region55: #{tpu_custom_call.1} parent=5 // pred_region
        // Predicated region
        $region57: #{tpu_custom_call.1} parent=55 // pred_check
          %p331 = pneg %p40
        $region58: #{tpu_custom_call.1} parent=55 // pred_check_branch
          %333 = sbr.rel (%p331) target = $region60
        $region59: #{tpu_custom_call.1} parent=55 // pred_region
          %p334 = scmp.lt.s32.totalorder %s20, 1
          %s335 = scalar_select %p334, %s20, 1
          %s336 = scalar_lea.vmem %s0, %s335
        $region60: #{tpu_custom_call.1} parent=55 // pred_fallthru
          _
      $region56: #{tpu_custom_call.1} parent=5 // pred_fallthru
        _
      %p337 = scmp.le.s32.totalorder 1, %s20
      %p338 = scmp.lt.s32.totalorder %s20, 3
      %p339 = pnand %p337, %p338
      %p340 = pneg %p339
      // Predicated region
      $region61: #{tpu_custom_call.1} parent=5 // pred_check
        _
      $region62: #{tpu_custom_call.1} parent=5 // pred_check_branch
        %342 = sbr.rel (%p339) target = $region64
      $region63: #{tpu_custom_call.1} parent=5 // pred_region
        %s343 = ssub.s32 %s20, 1
        %p344 = scmp.lt.s32.totalorder %s25, 1
        %s345 = scalar_select %p344, %s25, 1
        %s346 = scalar_lea.vmem %s0, %s345
        %p347 = pneg %p46
        %p348 = pneg %p43
        %p349 = pneg %p67
        %p350 = pneg %p64
        %p351 = pneg %p88
        %p352 = pneg %p85
        %p353 = pneg %p109
        %p354 = pneg %p106
        %p355 = pneg %p130
        %p356 = pneg %p127
        %p357 = pneg %p151
        %p358 = pneg %p148
        %p359 = pneg %p172
        %p360 = pneg %p169
        %p361 = pneg %p193
        %p362 = pneg %p190
        %p363 = pneg %p214
        %p364 = pneg %p211
        %p365 = pneg %p235
        %p366 = pneg %p232
        %p367 = pneg %p256
        %p368 = pneg %p253
        %p369 = pneg %p282
        %p370 = pneg %p279
        %s371 = sand.u32 %s269, 1
        %s372 = scalar_lea.sflag [#allocation3], %s371
        %s373 = sand.u32 %s269, 1
        %s374 = scalar_lea.vmem [#allocation2], %s373
        %p375 = scmp.lt.s32.totalorder %s25, 1
        %s376 = scalar_select %p375, %s25, 1
        %s377 = scalar_lea.vmem %s0, %s376
        %v378 = vld [vmem:[%s377] sm:$0x1]
        %v380 = vperm.slane %v378, 0
        %381 = vrot.lane.b32.xlu0 %v380, 127
        %v382 = vpop.permute.xlu0 %381
        %384 = vrot.lane.b32.xlu0 %v380, 126
        %v385 = vpop.permute.xlu0 %384
        %vm387 = vcmask 1040384
        %v388 = vsel %vm387, %v378, %v382
        %vm389 = vcmask 1041408
        %v390 = vsel %vm389, %v388, %v385
        %v391 = vld [vmem:[%s1] sm:$0xff]
        %v392 = vld [vmem:[%s2] sm:$0xff]
        %394 = vset.pattern.permute.xlu0 0
        %395 = vperm.xlu0 %394, %v392
        %v396 = vpop.permute.xlu0 %395
        %vm398 = vcmask 23552
        %v400 = vsel %vm398, %v391, 0
        %vm402 = vcmask 1042432
        %v404 = vsel %vm402, %v390, 0
        %406 = vmatpush.msra.mxu0 0.0
        %407 = vmatpush.msra.mxu0 0.0
        %408 = vmatpush.msra.mxu0 0.0
        %409 = vmatpush.msra.mxu0 0.0
        %410 = vmatpush.msra.mxu0 0.0
        %411 = vmatpush.msra.mxu0 0.0
        %412 = vmatpush.msra.mxu0 0.0
        %413 = vmatpush.msra.mxu0 0.0
        %414 = vmatpush.msra.mxu0 0.0
        %415 = vmatpush.msra.mxu0 0.0
        %416 = vmatpush.msra.mxu0 0.0
        %417 = vmatpush.msra.mxu0 0.0
        %418 = vmatpush.msra.mxu0 0.0
        %419 = vmatpush.msra.mxu0 0.0
        %420 = vmatpush.msra.mxu0 0.0
        %421 = vmatpush.msra.mxu0 %v404
        %422 = vmatmul.f32.gmra.mxu0 %v400
        %v423 = vpop.f32.mrf.mxu0
        %v424 = vadd.f32 %v396, %v423
        %425 = vdwg.mxu0
        %v426 = vmax.f32 %v424, 0.0
        %428 = vrot.lane.b32.xlu0 %v426, 127
        %v429 = vpop.permute.xlu0 %428
        %431 = vrot.lane.b32.xlu0 %v426, 126
        %v432 = vpop.permute.xlu0 %431
        %v434 = vld [vmem:[%s3] sm:$0xff]
        %v435 = vld [vmem:[%s4] sm:$0xff]
        %437 = vset.pattern.permute.xlu0 0
        %438 = vperm.xlu0 %437, %v435
        %v439 = vpop.permute.xlu0 %438
        %vm441 = vcmask 195584
        %v443 = vsel %vm441, %v434, 0
        %445 = vmatpush.msra.mxu0 0.0
        %446 = vmatpush.msra.mxu0 0.0
        %447 = vmatpush.msra.mxu0 0.0
        %448 = vmatpush.msra.mxu0 0.0
        %449 = vmatpush.msra.mxu0 0.0
        %450 = vmatpush.msra.mxu0 0.0
        %451 = vmatpush.msra.mxu0 0.0
        %452 = vmatpush.msra.mxu0 0.0
        %453 = vmatpush.msra.mxu0 0.0
        %454 = vmatpush.msra.mxu0 0.0
        %455 = vmatpush.msra.mxu0 0.0
        %456 = vmatpush.msra.mxu0 0.0
        %457 = vmatpush.msra.mxu0 0.0
        %458 = vmatpush.msra.mxu0 %v432
        %459 = vmatpush.msra.mxu0 %v429
        %460 = vmatpush.msra.mxu0 %v426
        %461 = vmatmul.f32.gmra.mxu0 %v443
        %v462 = vpop.f32.mrf.mxu0
        %v463 = vadd.f32 %v439, %v462
        %464 = vdwg.mxu0
        %v465 = vmax.f32 %v463, 0.0
        %467 = vrot.lane.b32.xlu0 %v465, 127
        %v468 = vpop.permute.xlu0 %467
        %470 = vrot.lane.b32.xlu0 %v465, 126
        %v471 = vpop.permute.xlu0 %470
        %473 = vrot.lane.b32.xlu0 %v465, 125
        %v474 = vpop.permute.xlu0 %473
        %476 = vrot.lane.b32.xlu0 %v465, 124
        %v477 = vpop.permute.xlu0 %476
        %479 = vrot.lane.b32.xlu0 %v465, 123
        %v480 = vpop.permute.xlu0 %479
        %v482 = vld [vmem:[%s5] sm:$0xff]
        %v483 = vld [vmem:[%s6] sm:$0xff]
        %485 = vset.pattern.permute.xlu0 0
        %486 = vperm.xlu0 %485, %v483
        %v487 = vpop.permute.xlu0 %486
        %vm489 = vcmask 392192
        %v491 = vsel %vm489, %v482, 0
        %493 = vmatpush.msra.mxu0 0.0
        %494 = vmatpush.msra.mxu0 0.0
        %495 = vmatpush.msra.mxu0 0.0
        %496 = vmatpush.msra.mxu0 0.0
        %497 = vmatpush.msra.mxu0 0.0
        %498 = vmatpush.msra.mxu0 0.0
        %499 = vmatpush.msra.mxu0 0.0
        %500 = vmatpush.msra.mxu0 0.0
        %501 = vmatpush.msra.mxu0 0.0
        %502 = vmatpush.msra.mxu0 0.0
        %503 = vmatpush.msra.mxu0 %v480
        %504 = vmatpush.msra.mxu0 %v477
        %505 = vmatpush.msra.mxu0 %v474
        %506 = vmatpush.msra.mxu0 %v471
        %507 = vmatpush.msra.mxu0 %v468
        %508 = vmatpush.msra.mxu0 %v465
        %509 = vmatmul.f32.gmra.mxu0 %v491
        %v510 = vpop.f32.mrf.mxu0
        %v511 = vadd.f32 %v487, %v510
        %512 = vdwg.mxu0
        %v513 = vmax.f32 %v511, 0.0
        %515 = vrot.lane.b32.xlu0 %v513, 127
        %v516 = vpop.permute.xlu0 %515
        %v518 = vmax.f32 %v513, %v516
        %v519 = vld [vmem:[%s8] sm:$0x1]
        %v520 = vld [vmem:[%s7] sm:$0xff]
        %v521 = vld [vmem:[%s7 + $0x8] sm:$0xff]
        %v522 = vld [vmem:[%s7 + $0x10] sm:$0xff]
        %v523 = vld [vmem:[%s7 + $0x18] sm:$0xff]
        %v524 = vld [vmem:[%s7 + $0x20] sm:$0xff]
        %v525 = vld [vmem:[%s7 + $0x28] sm:$0xff]
        %v526 = vld [vmem:[%s7 + $0x30] sm:$0x1f]
        %vm527 = vcmask 433152
        %v529 = vsel %vm527, %v518, 0
        %vm531 = vcmask 1044480
        %v533 = vsel %vm531, %v526, 0
        %535 = vmatpush.msra.mxu0 0.0
        %536 = vmatpush.msra.mxu0 0.0
        %537 = vmatpush.msra.mxu0 0.0
        %538 = vmatpush.msra.mxu0 0.0
        %539 = vmatpush.msra.mxu0 0.0
        %540 = vmatpush.msra.mxu0 0.0
        %541 = vmatpush.msra.mxu0 0.0
        %542 = vmatpush.msra.mxu0 0.0
        %543 = vmatpush.msra.mxu0 0.0
        %544 = vmatpush.msra.mxu0 %v533
        %545 = vmatpush.msra.mxu0 %v525
        %546 = vmatpush.msra.mxu0 %v524
        %547 = vmatpush.msra.mxu0 %v523
        %548 = vmatpush.msra.mxu0 %v522
        %549 = vmatpush.msra.mxu0 %v521
        %550 = vmatpush.msra.mxu0 %v520
        %551 = vmatmul.f32.gmra.mxu0 %v529
        %v552 = vpop.f32.mrf.mxu0
        %v553 = vadd.f32 0.0, %v552
        %554 = vdwg.mxu0
        %v555 = vadd.f32 %v519, %v553
        %s556 = scalar_lea.vmem %s7, 56
        %v557 = vld [vmem:[%s556] sm:$0xff]
        %v558 = vld [vmem:[%s556 + $0x8] sm:$0xff]
        %v559 = vld [vmem:[%s556 + $0x10] sm:$0xff]
        %v560 = vld [vmem:[%s556 + $0x18] sm:$0xff]
        %v561 = vld [vmem:[%s556 + $0x20] sm:$0xff]
        %v562 = vld [vmem:[%s556 + $0x28] sm:$0xff]
        %v563 = vld [vmem:[%s556 + $0x30] sm:$0x1f]
        %v564 = vrot.slane %v518, 1
        %v565 = vsel %vm527, %v564, 0
        %v568 = vsel %vm531, %v563, 0
        %570 = vmatpush.msra.mxu0 0.0
        %571 = vmatpush.msra.mxu0 0.0
        %572 = vmatpush.msra.mxu0 0.0
        %573 = vmatpush.msra.mxu0 0.0
        %574 = vmatpush.msra.mxu0 0.0
        %575 = vmatpush.msra.mxu0 0.0
        %576 = vmatpush.msra.mxu0 0.0
        %577 = vmatpush.msra.mxu0 0.0
        %578 = vmatpush.msra.mxu0 0.0
        %579 = vmatpush.msra.mxu0 %v568
        %580 = vmatpush.msra.mxu0 %v562
        %581 = vmatpush.msra.mxu0 %v561
        %582 = vmatpush.msra.mxu0 %v560
        %583 = vmatpush.msra.mxu0 %v559
        %584 = vmatpush.msra.mxu0 %v558
        %585 = vmatpush.msra.mxu0 %v557
        %586 = vmatmul.f32.gmra.mxu0 %v565
        %v587 = vpop.f32.mrf.mxu0
        %v588 = vadd.f32 0.0, %v587
        %589 = vdwg.mxu0
        %v590 = vadd.f32 %v555, %v588
        %s591 = scalar_lea.vmem %s7, 112
        %v592 = vld [vmem:[%s591] sm:$0xff]
        %v593 = vld [vmem:[%s591 + $0x8] sm:$0xff]
        %v594 = vld [vmem:[%s591 + $0x10] sm:$0xff]
        %v595 = vld [vmem:[%s591 + $0x18] sm:$0xff]
        %v596 = vld [vmem:[%s591 + $0x20] sm:$0xff]
        %v597 = vld [vmem:[%s591 + $0x28] sm:$0xff]
        %v598 = vld [vmem:[%s591 + $0x30] sm:$0x1f]
        %v599 = vrot.slane %v518, 2
        %v600 = vsel %vm527, %v599, 0
        %v603 = vsel %vm531, %v598, 0
        %605 = vmatpush.msra.mxu0 0.0
        %606 = vmatpush.msra.mxu0 0.0
        %607 = vmatpush.msra.mxu0 0.0
        %608 = vmatpush.msra.mxu0 0.0
        %609 = vmatpush.msra.mxu0 0.0
        %610 = vmatpush.msra.mxu0 0.0
        %611 = vmatpush.msra.mxu0 0.0
        %612 = vmatpush.msra.mxu0 0.0
        %613 = vmatpush.msra.mxu0 0.0
        %614 = vmatpush.msra.mxu0 %v603
        %615 = vmatpush.msra.mxu0 %v597
        %616 = vmatpush.msra.mxu0 %v596
        %617 = vmatpush.msra.mxu0 %v595
        %618 = vmatpush.msra.mxu0 %v594
        %619 = vmatpush.msra.mxu0 %v593
        %620 = vmatpush.msra.mxu0 %v592
        %621 = vmatmul.f32.gmra.mxu0 %v600
        %v622 = vpop.f32.mrf.mxu0
        %v623 = vadd.f32 0.0, %v622
        %624 = vdwg.mxu0
        %v625 = vadd.f32 %v590, %v623
        %s626 = scalar_lea.vmem %s7, 168
        %v627 = vld [vmem:[%s626] sm:$0xff]
        %v628 = vld [vmem:[%s626 + $0x8] sm:$0xff]
        %v629 = vld [vmem:[%s626 + $0x10] sm:$0xff]
        %v630 = vld [vmem:[%s626 + $0x18] sm:$0xff]
        %v631 = vld [vmem:[%s626 + $0x20] sm:$0xff]
        %v632 = vld [vmem:[%s626 + $0x28] sm:$0xff]
        %v633 = vld [vmem:[%s626 + $0x30] sm:$0x1f]
        %v634 = vrot.slane %v518, 3
        %v635 = vsel %vm527, %v634, 0
        %v638 = vsel %vm531, %v633, 0
        %640 = vmatpush.msra.mxu0 0.0
        %641 = vmatpush.msra.mxu0 0.0
        %642 = vmatpush.msra.mxu0 0.0
        %643 = vmatpush.msra.mxu0 0.0
        %644 = vmatpush.msra.mxu0 0.0
        %645 = vmatpush.msra.mxu0 0.0
        %646 = vmatpush.msra.mxu0 0.0
        %647 = vmatpush.msra.mxu0 0.0
        %648 = vmatpush.msra.mxu0 0.0
        %649 = vmatpush.msra.mxu0 %v638
        %650 = vmatpush.msra.mxu0 %v632
        %651 = vmatpush.msra.mxu0 %v631
        %652 = vmatpush.msra.mxu0 %v630
        %653 = vmatpush.msra.mxu0 %v629
        %654 = vmatpush.msra.mxu0 %v628
        %655 = vmatpush.msra.mxu0 %v627
        %656 = vmatmul.f32.gmra.mxu0 %v635
        %v657 = vpop.f32.mrf.mxu0
        %v658 = vadd.f32 0.0, %v657
        %659 = vdwg.mxu0
        %v660 = vadd.f32 %v625, %v658
        %s661 = scalar_lea.vmem %s7, 224
        %v662 = vld [vmem:[%s661] sm:$0xff]
        %v663 = vld [vmem:[%s661 + $0x8] sm:$0xff]
        %v664 = vld [vmem:[%s661 + $0x10] sm:$0xff]
        %v665 = vld [vmem:[%s661 + $0x18] sm:$0xff]
        %v666 = vld [vmem:[%s661 + $0x20] sm:$0xff]
        %v667 = vld [vmem:[%s661 + $0x28] sm:$0xff]
        %v668 = vld [vmem:[%s661 + $0x30] sm:$0x1f]
        %v669 = vrot.slane %v518, 4
        %v670 = vsel %vm527, %v669, 0
        %v673 = vsel %vm531, %v668, 0
        %675 = vmatpush.msra.mxu0 0.0
        %676 = vmatpush.msra.mxu0 0.0
        %677 = vmatpush.msra.mxu0 0.0
        %678 = vmatpush.msra.mxu0 0.0
        %679 = vmatpush.msra.mxu0 0.0
        %680 = vmatpush.msra.mxu0 0.0
        %681 = vmatpush.msra.mxu0 0.0
        %682 = vmatpush.msra.mxu0 0.0
        %683 = vmatpush.msra.mxu0 0.0
        %684 = vmatpush.msra.mxu0 %v673
        %685 = vmatpush.msra.mxu0 %v667
        %686 = vmatpush.msra.mxu0 %v666
        %687 = vmatpush.msra.mxu0 %v665
        %688 = vmatpush.msra.mxu0 %v664
        %689 = vmatpush.msra.mxu0 %v663
        %690 = vmatpush.msra.mxu0 %v662
        %691 = vmatmul.f32.gmra.mxu0 %v670
        %v692 = vpop.f32.mrf.mxu0
        %v693 = vadd.f32 0.0, %v692
        %694 = vdwg.mxu0
        %v695 = vadd.f32 %v660, %v693
        %s696 = scalar_lea.vmem %s7, 280
        %v697 = vld [vmem:[%s696] sm:$0xff]
        %v698 = vld [vmem:[%s696 + $0x8] sm:$0xff]
        %v699 = vld [vmem:[%s696 + $0x10] sm:$0xff]
        %v700 = vld [vmem:[%s696 + $0x18] sm:$0xff]
        %v701 = vld [vmem:[%s696 + $0x20] sm:$0xff]
        %v702 = vld [vmem:[%s696 + $0x28] sm:$0xff]
        %v703 = vld [vmem:[%s696 + $0x30] sm:$0x1f]
        %v704 = vrot.slane %v518, 5
        %v705 = vsel %vm527, %v704, 0
        %v708 = vsel %vm531, %v703, 0
        %710 = vmatpush.msra.mxu0 0.0
        %711 = vmatpush.msra.mxu0 0.0
        %712 = vmatpush.msra.mxu0 0.0
        %713 = vmatpush.msra.mxu0 0.0
        %714 = vmatpush.msra.mxu0 0.0
        %715 = vmatpush.msra.mxu0 0.0
        %716 = vmatpush.msra.mxu0 0.0
        %717 = vmatpush.msra.mxu0 0.0
        %718 = vmatpush.msra.mxu0 0.0
        %719 = vmatpush.msra.mxu0 %v708
        %720 = vmatpush.msra.mxu0 %v702
        %721 = vmatpush.msra.mxu0 %v701
        %722 = vmatpush.msra.mxu0 %v700
        %723 = vmatpush.msra.mxu0 %v699
        %724 = vmatpush.msra.mxu0 %v698
        %725 = vmatpush.msra.mxu0 %v697
        %726 = vmatmul.f32.gmra.mxu0 %v705
        %v727 = vpop.f32.mrf.mxu0
        %v728 = vadd.f32 0.0, %v727
        %729 = vdwg.mxu0
        %v730 = vadd.f32 %v695, %v728
        %s731 = scalar_lea.vmem %s7, 336
        %v732 = vld [vmem:[%s731] sm:$0xff]
        %v733 = vld [vmem:[%s731 + $0x8] sm:$0xff]
        %v734 = vld [vmem:[%s731 + $0x10] sm:$0xff]
        %v735 = vld [vmem:[%s731 + $0x18] sm:$0xff]
        %v736 = vld [vmem:[%s731 + $0x20] sm:$0xff]
        %v737 = vld [vmem:[%s731 + $0x28] sm:$0xff]
        %v738 = vld [vmem:[%s731 + $0x30] sm:$0x1f]
        %v739 = vrot.slane %v518, 6
        %v740 = vsel %vm527, %v739, 0
        %v743 = vsel %vm531, %v738, 0
        %745 = vmatpush.msra.mxu0 0.0
        %746 = vmatpush.msra.mxu0 0.0
        %747 = vmatpush.msra.mxu0 0.0
        %748 = vmatpush.msra.mxu0 0.0
        %749 = vmatpush.msra.mxu0 0.0
        %750 = vmatpush.msra.mxu0 0.0
        %751 = vmatpush.msra.mxu0 0.0
        %752 = vmatpush.msra.mxu0 0.0
        %753 = vmatpush.msra.mxu0 0.0
        %754 = vmatpush.msra.mxu0 %v743
        %755 = vmatpush.msra.mxu0 %v737
        %756 = vmatpush.msra.mxu0 %v736
        %757 = vmatpush.msra.mxu0 %v735
        %758 = vmatpush.msra.mxu0 %v734
        %759 = vmatpush.msra.mxu0 %v733
        %760 = vmatpush.msra.mxu0 %v732
        %761 = vmatmul.f32.gmra.mxu0 %v740
        %v762 = vpop.f32.mrf.mxu0
        %v763 = vadd.f32 0.0, %v762
        %764 = vdwg.mxu0
        %v765 = vadd.f32 %v730, %v763
        %s766 = scalar_lea.vmem %s7, 392
        %v767 = vld [vmem:[%s766] sm:$0xff]
        %v768 = vld [vmem:[%s766 + $0x8] sm:$0xff]
        %v769 = vld [vmem:[%s766 + $0x10] sm:$0xff]
        %v770 = vld [vmem:[%s766 + $0x18] sm:$0xff]
        %v771 = vld [vmem:[%s766 + $0x20] sm:$0xff]
        %v772 = vld [vmem:[%s766 + $0x28] sm:$0xff]
        %v773 = vld [vmem:[%s766 + $0x30] sm:$0x1f]
        %v774 = vrot.slane %v518, 7
        %v775 = vsel %vm527, %v774, 0
        %v778 = vsel %vm531, %v773, 0
        %780 = vmatpush.msra.mxu0 0.0
        %781 = vmatpush.msra.mxu0 0.0
        %782 = vmatpush.msra.mxu0 0.0
        %783 = vmatpush.msra.mxu0 0.0
        %784 = vmatpush.msra.mxu0 0.0
        %785 = vmatpush.msra.mxu0 0.0
        %786 = vmatpush.msra.mxu0 0.0
        %787 = vmatpush.msra.mxu0 0.0
        %788 = vmatpush.msra.mxu0 0.0
        %789 = vmatpush.msra.mxu0 %v778
        %790 = vmatpush.msra.mxu0 %v772
        %791 = vmatpush.msra.mxu0 %v771
        %792 = vmatpush.msra.mxu0 %v770
        %793 = vmatpush.msra.mxu0 %v769
        %794 = vmatpush.msra.mxu0 %v768
        %795 = vmatpush.msra.mxu0 %v767
        %796 = vmatmul.f32.gmra.mxu0 %v775
        %v797 = vpop.f32.mrf.mxu0
        %v798 = vadd.f32 0.0, %v797
        %799 = vdwg.mxu0
        %v800 = vadd.f32 %v765, %v798
        %v801 = vmax.f32 %v800, 0.0
        %v802 = vld [vmem:[%s9] sm:$0xff]
        %v803 = vld [vmem:[%s9 + $0x8] sm:$0xff]
        %v804 = vld [vmem:[%s9 + $0x10] sm:$0xff]
        %v805 = vld [vmem:[%s9 + $0x18] sm:$0xff]
        %v806 = vld [vmem:[%s9 + $0x20] sm:$0xff]
        %v807 = vld [vmem:[%s9 + $0x28] sm:$0xff]
        %v808 = vld [vmem:[%s9 + $0x30] sm:$0xff]
        %v809 = vld [vmem:[%s9 + $0x38] sm:$0xff]
        %v810 = vld [vmem:[%s10] sm:$0x1]
        %vm811 = vcmask 523264
        %v813 = vsel %vm811, %v801, 0
        %815 = vmatpush.msra.mxu0 0.0
        %816 = vmatpush.msra.mxu0 0.0
        %817 = vmatpush.msra.mxu0 0.0
        %818 = vmatpush.msra.mxu0 0.0
        %819 = vmatpush.msra.mxu0 0.0
        %820 = vmatpush.msra.mxu0 0.0
        %821 = vmatpush.msra.mxu0 0.0
        %822 = vmatpush.msra.mxu0 0.0
        %823 = vmatpush.msra.mxu0 %v809
        %824 = vmatpush.msra.mxu0 %v808
        %825 = vmatpush.msra.mxu0 %v807
        %826 = vmatpush.msra.mxu0 %v806
        %827 = vmatpush.msra.mxu0 %v805
        %828 = vmatpush.msra.mxu0 %v804
        %829 = vmatpush.msra.mxu0 %v803
        %830 = vmatpush.msra.mxu0 %v802
        %831 = vmatmul.f32.gmra.mxu0 %v813
        %v832 = vpop.f32.mrf.mxu0
        %v833 = vadd.f32 %v810, %v832
        %834 = vdwg.mxu0
        %vm835 = vcmask 32768
        %v836 = vsel %vm835, %v833, -inf
        %837 = vmax.xlane.f32.xlu0 %v836
        %v838 = vpop.xlane.xlu0 %837
        %v839 = vsub.f32 %v833, %v838
        %v840 = vmul.f32 %v839, 1.442695
        %v841 = vpow.pop %v840
        %v842 = vsel %vm835, %v841, 0.0
        %843 = vadd.xlane.f32.xlu0 %v842
        %v844 = vpop.xlane.xlu0 %843
        %v845 = vrcp.pop %v844
        %v846 = vmul.f32 %v844, %v845
        %v847 = vsub.f32 2.0, %v846
        %v848 = vmul.f32 %v845, %v847
        %v849 = vmul.f32 %v841, %v848
        %850 = vst.msk [vmem:[%s374] sm:$0x1] %vm835, %v849
        %s851 = sand.u32 %s269, 1
        %s852 = scalar_lea.sflag [#allocation3], %s851
        %s853 = sand.u32 %s269, 1
        %s854 = scalar_lea.vmem [#allocation2], %s853
        // Predicated region
        $region65: #{tpu_custom_call.1} parent=63 // pred_check
          %p855 = pneg %p279
        $region66: #{tpu_custom_call.1} parent=63 // pred_check_branch
          %857 = sbr.rel (%p855) target = $region68
        $region67: #{tpu_custom_call.1} parent=63 // pred_region
          %859 = vsyncadd %s852, 0
          %s860 = scalar_lea.hbm %s11, %s25
          %s862 = sshll.u32 %s854, 4
          %s863 = int_to_ptr.vmem [resolvable:$true] %s862
          %s864 = sshll.u32 %s860, 4
          %s865 = int_to_ptr.hbm [resolvable:$true] %s864
          %867 = dma.vmem_to_hbm [thread:$0]  %s863, 16, %s865, %s852
        $region68: #{tpu_custom_call.1} parent=63 // pred_fallthru
          _
      $region64: #{tpu_custom_call.1} parent=5 // pred_fallthru
        _
      %p868 = scmp.le.s32.totalorder 2, %s20
      // Predicated region
      $region69: #{tpu_custom_call.1} parent=5 // pred_check
        %p869 = pneg %p868
      $region70: #{tpu_custom_call.1} parent=5 // pred_check_branch
        %871 = sbr.rel (%p869) target = $region72
      $region71: #{tpu_custom_call.1} parent=5 // pred_region
        %s872 = ssub.s32 %s20, 2
        // Predicated region
        $region73: #{tpu_custom_call.1} parent=71 // pred_check
          %p873 = pneg %p285
        $region74: #{tpu_custom_call.1} parent=71 // pred_check_branch
          %875 = sbr.rel (%p873) target = $region76
        $region75: #{tpu_custom_call.1} parent=71 // pred_region
          %s876 = sand.u32 %s270, 1
          %s877 = scalar_lea.sflag [#allocation3], %s876
          %s878 = sand.u32 %s270, 1
          %s879 = scalar_lea.vmem [#allocation2], %s878
          %881 = dma.done %s877, 16
        $region76: #{tpu_custom_call.1} parent=71 // pred_fallthru
          _
      $region72: #{tpu_custom_call.1} parent=5 // pred_fallthru
        _
    $region6: #{tpu_custom_call.1} parent=1 // loop_footer
      %s24 = sadd.s32 1, %s20
    $region7: #{tpu_custom_call.1} parent=1 // loop_footer_branch
      %19 = sbr.rel target = $region3
    $region8: #{tpu_custom_call.1} parent=1 // loop_exit
      _
    %882 = vsyncpa [#allocation3], 1
    %s883 = scalar_lea.sflag [#allocation3], 1
    %884 = vsyncpa %s883, 1

</llo_original>
